<compile_context>
chip_gen: v6e
topology: v6e:2x2x1
jax: 0.10.0
libtpu: 0.0.40
codegen_flags: <defaults>
</compile_context>

<pallas_src>
import jax
import jax.numpy as jnp
from jax.experimental import pallas as pl
from jax.experimental.pallas import tpu as pltpu

BN_EPS = 1e-5


def _round_up(x, m):
    return (x + m - 1) // m * m


def _head_kernel(fm_ref, w_ref, b_ref, out_ref):
    # fm_ref:  [TB, C, HW]  backbone featmap tile, native dtype (bf16/f32)
    # w_ref:   [C, D]       fused weight = W_reduce^T * bn_scale / HW   (f32)
    # b_ref:   [1, D]       fused bias   = (b - mean) * bn_scale + beta (f32)
    # out_ref: [TB, D]      feat
    #
    # AdaptiveAvgPool2d(1) + flatten(1): f32-accumulated sum over the spatial
    # (lane) axis; the 1/HW factor lives in w_ref, so no f32 copy of the
    # featmap tile is materialized.
    pooled = jnp.sum(fm_ref[...], axis=-1, dtype=jnp.float32)         # [TB, C]

    # reduce (Linear) + bottleneck (eval BatchNorm1d), folded into w/b.
    # Matmul FLOPs are negligible vs. the featmap read (mem-bound kernel).
    out = jnp.dot(pooled, w_ref[...],
                  preferred_element_type=jnp.float32) + b_ref[...]    # [TB, D]

    out_ref[...] = out.astype(out_ref.dtype)


def _vmem_plan(B, C, D, HW, fm_itemsize):
    """Generation-aware VMEM budgeting. Returns (batch_tile, vmem_limit_bytes)."""
    try:
        vmem_cap = int(pltpu.get_tpu_info().vmem_capacity_bytes)
    except Exception:
        vmem_cap = 64 * 1024 * 1024            # conservative (v7x per-TC)

    if vmem_cap >= 96 * 1024 * 1024:           # v5e / v6e: 128 MiB physical
        vmem_limit = 100 * 1024 * 1024
    else:                                      # v7x: 64 MiB per TensorCore
        vmem_limit = min(52 * 1024 * 1024, (vmem_cap * 13) // 16)

    # Grid-invariant residents (single-buffered weight + bias), VMEM-padded.
    w_bytes = _round_up(C, 8) * _round_up(D, 128) * 4
    b_bytes = 8 * _round_up(D, 128) * 4
    headroom = 4 * 1024 * 1024                 # output tiles + internal scratch
    fm_budget = max(8 * 1024 * 1024, vmem_limit - w_bytes - b_bytes - headroom)

    # Per-sample featmap footprint in VMEM *including* lane/sublane padding.
    sub = max(8, 32 // fm_itemsize)            # f32 -> 8, bf16 -> 16, int8 -> 32
    per_sample = _round_up(C, sub) * _round_up(HW, 128) * fm_itemsize

    tb = max(1, fm_budget // (2 * per_sample))   # double-buffered featmap tile
    tb = min(tb, B)
    # Guarantee >= 2 grid steps for decently sized batches so a dual-TC chip
    # (v7x) shards the "parallel" batch axis across both cores.
    if B >= 16:
        tb = min(tb, max(8, (pl.cdiv(B, 2) // 8) * 8))
    if tb < B and tb >= 8:
        tb -= tb % 8                           # unmasked output sublane tiling
    return max(1, tb), vmem_limit


def baseline_reduce_head(featmap_nchw, w_reduce, b_reduce,
                         bn_gamma, bn_beta, bn_mean, bn_var):
    """featmap_nchw: [B, C, H, W] backbone output (native dtype).

    Returns feat [B, D] (f32), matching eval-mode
    gap -> flatten -> reduce(Linear) -> bottleneck(BatchNorm1d).
    """
    B, C, H, W = featmap_nchw.shape
    D = w_reduce.shape[0]                      # PyTorch Linear weight is [out, in]
    HW = H * W

    # Free row-major reshape of NCHW -> [B, C, HW]; no transpose, no cast.
    fm = featmap_nchw.reshape(B, C, HW)
    itemsize = jnp.dtype(fm.dtype).itemsize

    # Constant-fold eval-mode BatchNorm1d + Linear bias + GAP's 1/HW into w/b.
    scale = (bn_gamma.astype(jnp.float32) *
             jax.lax.rsqrt(bn_var.astype(jnp.float32) + BN_EPS))           # [D]
    w_fused = (w_reduce.astype(jnp.float32).T * scale[None, :]) / HW       # [C, D]
    b_fused = ((b_reduce.astype(jnp.float32) - bn_mean.astype(jnp.float32))
               * scale + bn_beta.astype(jnp.float32)).reshape(1, D)        # [1, D]

    TB, vmem_limit = _vmem_plan(B, C, D, HW, itemsize)
    grid = (pl.cdiv(B, TB),)

    feat = pl.pallas_call(
        _head_kernel,
        out_shape=jax.ShapeDtypeStruct((B, D), jnp.float32),
        grid=grid,
        in_specs=[
            # streamed featmap tile (default double-buffering)
            pl.BlockSpec((TB, C, HW), lambda i: (i, 0, 0)),
            # grid-invariant fused weight / bias: single-buffered residents
            pl.BlockSpec((C, D), lambda i: (0, 0),
                         pipeline_mode=pl.Buffered(1)),
            pl.BlockSpec((1, D), lambda i: (0, 0),
                         pipeline_mode=pl.Buffered(1)),
        ],
        out_specs=pl.BlockSpec((TB, D), lambda i: (i, 0)),
        compiler_params=pltpu.CompilerParams(
            dimension_semantics=("parallel",),
            vmem_limit_bytes=vmem_limit,
        ),
        cost_estimate=pl.CostEstimate(
            flops=B * C * HW + 2 * B * C * D,          # pooling adds + matmul
            transcendentals=0,
            bytes_accessed=(B * C * HW * itemsize      # featmap read
                            + C * D * 4 + D * 4        # fused weight + bias
                            + B * D * 4),              # output written once
        ),
    )(fm, w_fused, b_fused)
    return feat


def _reference(featmap_nchw, w_reduce, b_reduce, bn_gamma, bn_beta, bn_mean,
               bn_var):
    gf = jnp.mean(featmap_nchw.astype(jnp.float32), axis=(2, 3))      # GAP
    emb = gf @ w_reduce.T.astype(jnp.float32) + b_reduce
    return (emb - bn_mean) / jnp.sqrt(bn_var + BN_EPS) * bn_gamma + bn_beta


if __name__ == "__main__":
    # Small-but-consistent shapes: in_planes (backbone channels) = 256,
    # EMBEDDING_DIM = 128, featmap spatial 8x8, batch 2.
    B, C, H, W, D = 2, 256, 8, 8, 128

    key = jax.random.PRNGKey(0)
    k_fm, k_w, k_g = jax.random.split(key, 3)

    featmap = jax.random.normal(k_fm, (B, C, H, W), dtype=jnp.float32)

    # reduce = nn.Linear(in_planes, feature_dim): deterministic synthetic init
    w_reduce = jax.random.normal(k_w, (D, C), dtype=jnp.float32) * 0.02
    b_reduce = jnp.zeros((D,), dtype=jnp.float32)

    # bottleneck = nn.BatchNorm1d(D) with weights_init_kaiming:
    #   gamma ~ N(0, 0.001), beta = 0; fresh running stats mean=0, var=1.
    bn_gamma = jax.random.normal(k_g, (D,), dtype=jnp.float32) * 0.001
    bn_beta = jnp.zeros((D,), dtype=jnp.float32)
    bn_mean = jnp.zeros((D,), dtype=jnp.float32)
    bn_var = jnp.ones((D,), dtype=jnp.float32)

    ref = _reference(featmap, w_reduce, b_reduce, bn_gamma, bn_beta, bn_mean,
                     bn_var)

    # f32 featmap (tight check).
    feat = baseline_reduce_head(featmap, w_reduce, b_reduce,
                                bn_gamma, bn_beta, bn_mean, bn_var)
    feat = jax.block_until_ready(feat)
    assert feat.shape == (B, D)
    assert jnp.allclose(feat, ref, atol=1e-4, rtol=1e-4)

    # bf16 featmap on the wire (no wrapper cast) — mirrors a bf16 backbone;
    # looser tolerance for the reduced input precision.
    feat_bf16 = baseline_reduce_head(featmap.astype(jnp.bfloat16), w_reduce,
                                     b_reduce, bn_gamma, bn_beta, bn_mean,
                                     bn_var)
    feat_bf16 = jax.block_until_ready(feat_bf16)
    assert jnp.allclose(feat_bf16, ref, atol=1e-4, rtol=3e-2)

    print("KERNEL_OK")
</pallas_src>

<mosaic_0001>
module attributes {stable_mosaic.version = 11 : i64} {
  func.func @_head_kernel(%arg0: i32, %arg1: memref<2x256x64xf32, #tpu.memory_space<vmem>>, %arg2: memref<256x128xf32, #tpu.memory_space<vmem>>, %arg3: memref<1x128xf32, #tpu.memory_space<vmem>>, %arg4: memref<2x128xf32, #tpu.memory_space<vmem>>) attributes {dimension_semantics = [#tpu.dimension_semantics<parallel>], iteration_bounds = array<i64: 1>, scalar_prefetch = 0 : i64, scratch_operands = 0 : i64, tpu.core_type = #tpu.core_type<tc>, window_params = [{transform_indices = @transform_0, window_bounds = array<i64: 2, 256, 64>}, {pipeline_mode = #tpu.pipeline_mode<synchronous>, transform_indices = @transform_1, window_bounds = array<i64: 256, 128>}, {pipeline_mode = #tpu.pipeline_mode<synchronous>, transform_indices = @transform_2, window_bounds = array<i64: 1, 128>}, {transform_indices = @transform_3, window_bounds = array<i64: 2, 128>}]} {
    %c0 = arith.constant 0 : index
    %c0_0 = arith.constant 0 : index
    %c0_1 = arith.constant 0 : index
    %0 = vector.load %arg1[%c0, %c0_0, %c0_1] : memref<2x256x64xf32, #tpu.memory_space<vmem>>, vector<2x256x64xf32>
    %cst = arith.constant dense<0.000000e+00> : vector<2x256xf32>
    %1 = vector.multi_reduction <add>, %0, %cst [2] : vector<2x256x64xf32> to vector<2x256xf32>
    %c0_2 = arith.constant 0 : index
    %c0_3 = arith.constant 0 : index
    %2 = vector.load %arg2[%c0_2, %c0_3] : memref<256x128xf32, #tpu.memory_space<vmem>>, vector<256x128xf32>
    %cst_4 = arith.constant dense<0.000000e+00> : vector<2x128xf32>
    %3 = tpu.matmul %1, %2, %cst_4 {dimension_numbers = #tpu.dot_dimension_numbers<[1], [0], [0], [1], [0, 0, 1, 1], [], []>} : vector<2x256xf32>, vector<256x128xf32>, vector<2x128xf32> -> vector<2x128xf32>
    %c0_5 = arith.constant 0 : index
    %c0_6 = arith.constant 0 : index
    %4 = vector.load %arg3[%c0_5, %c0_6] : memref<1x128xf32, #tpu.memory_space<vmem>>, vector<1x128xf32>
    %5 = vector.broadcast %4 : vector<1x128xf32> to vector<2x128xf32>
    %6 = arith.addf %3, %5 : vector<2x128xf32>
    %c0_7 = arith.constant 0 : index
    %c0_8 = arith.constant 0 : index
    %7 = vector.load %arg4[%c0_7, %c0_8] : memref<2x128xf32, #tpu.memory_space<vmem>>, vector<2x128xf32>
    tpu.vector_store %arg4[%c0_7, %c0_8], %6 {strides = array<i32>} : memref<2x128xf32, #tpu.memory_space<vmem>>, vector<2x128xf32>,
    return
  }
  func.func @transform_0(%arg0: i32) -> (i32, i32, i32) {
    %c0_i32 = arith.constant 0 : i32
    %c0_i32_0 = arith.constant 0 : i32
    %c0_i32_1 = arith.constant 0 : i32
    return %arg0, %c0_i32, %c0_i32_0 : i32, i32, i32
  }
  func.func @transform_1(%arg0: i32) -> (i32, i32) {
    %c0_i32 = arith.constant 0 : i32
    %c0_i32_0 = arith.constant 0 : i32
    %c0_i32_1 = arith.constant 0 : i32
    return %c0_i32, %c0_i32_0 : i32, i32
  }
  func.func @transform_2(%arg0: i32) -> (i32, i32) {
    %c0_i32 = arith.constant 0 : i32
    %c0_i32_0 = arith.constant 0 : i32
    %c0_i32_1 = arith.constant 0 : i32
    return %c0_i32, %c0_i32_0 : i32, i32
  }
  func.func @transform_3(%arg0: i32) -> (i32, i32) {
    %c0_i32 = arith.constant 0 : i32
    %c0_i32_0 = arith.constant 0 : i32
    return %arg0, %c0_i32 : i32, i32
  }
}

</mosaic_0001>

<llo_original>
// kernel: tpu_custom_call.1
$region0: #{tpu_custom_call.1}
  #allocation0 [shape = 'u32[]', space=smem, size = 0x4, offset = 0x4, fixed_abs, tag = 'smem constant byte address 0x4 - core index']
  #allocation1 [shape = 'u32[144,128]{1,0:T(1,128)}', space=vmem, size = 0x12000, scoped, tag = 'internal scratch']
  %s0 = inlined_call_operand.vmem [shape: f32[2,256,64], index: 0, kind: input, shape index: {}]
  %s1 = inlined_call_operand.vmem [shape: f32[256,128], index: 1, kind: input, shape index: {}]
  %s2 = inlined_call_operand.vmem [shape: f32[1,128], index: 2, kind: input, shape index: {}]
  %s3 = inlined_call_operand.hbm [shape: f32[2,128], index: 3, kind: output, shape index: {}]
  %s4 = sld [smem:[#allocation0]]
  $region22: #{tpu_custom_call.1} parent=0
    _
  %s6 = ssub.s32 1, %s4
  %s7 = scalar_select 0, %s6, %s4
  $region1: #{tpu_custom_call.1} parent=0
    #allocation2 [shape = 'u8[1024]{0}', space=vmem, size = 0x400, scoped, tag = 'output window, operand 0, single buffered']
    #allocation3 [shape = 's32[1]{0}', space=sflag, size = 0x4, scoped, tag = 'scoped memory for tpu_custom_call.1']
    %8 = vsyncpa [#allocation3], 0
    // Predicated region
    $region2: #{tpu_custom_call.1} parent=1 // pred_check
      _
    $region3: #{tpu_custom_call.1} parent=1 // pred_check_branch
      %10 = sbr.rel (0) target = $region5
    $region4: #{tpu_custom_call.1} parent=1 // pred_region
      _
    $region5: #{tpu_custom_call.1} parent=1 // pred_fallthru
      _
    // Predicated region
    $region6: #{tpu_custom_call.1} parent=1 // pred_check
      _
    $region7: #{tpu_custom_call.1} parent=1 // pred_check_branch
      %12 = sbr.rel (0) target = $region9
    $region8: #{tpu_custom_call.1} parent=1 // pred_region
      _
    $region9: #{tpu_custom_call.1} parent=1 // pred_fallthru
      _
    // Predicated region
    $region10: #{tpu_custom_call.1} parent=1 // pred_check
      _
    $region11: #{tpu_custom_call.1} parent=1 // pred_check_branch
      %14 = sbr.rel (0) target = $region13
    $region12: #{tpu_custom_call.1} parent=1 // pred_region
      _
    $region13: #{tpu_custom_call.1} parent=1 // pred_fallthru
      _
    %v15 = vld [vmem:[%s0] sm:$0xff]
    %v16 = vld [vmem:[%s0 + $0x8] sm:$0xff]
    %v17 = vld [vmem:[%s0 + $0x10] sm:$0xff]
    %v18 = vld [vmem:[%s0 + $0x18] sm:$0xff]
    %v19 = vld [vmem:[%s0 + $0x20] sm:$0xff]
    %v20 = vld [vmem:[%s0 + $0x28] sm:$0xff]
    %v21 = vld [vmem:[%s0 + $0x30] sm:$0xff]
    %v22 = vld [vmem:[%s0 + $0x38] sm:$0xff]
    %v23 = vld [vmem:[%s0 + $0x40] sm:$0xff]
    %v24 = vld [vmem:[%s0 + $0x48] sm:$0xff]
    %v25 = vld [vmem:[%s0 + $0x50] sm:$0xff]
    %v26 = vld [vmem:[%s0 + $0x58] sm:$0xff]
    %v27 = vld [vmem:[%s0 + $0x60] sm:$0xff]
    %v28 = vld [vmem:[%s0 + $0x68] sm:$0xff]
    %v29 = vld [vmem:[%s0 + $0x70] sm:$0xff]
    %v30 = vld [vmem:[%s0 + $0x78] sm:$0xff]
    %v31 = vld [vmem:[%s0 + $0x80] sm:$0xff]
    %v32 = vld [vmem:[%s0 + $0x88] sm:$0xff]
    %v33 = vld [vmem:[%s0 + $0x90] sm:$0xff]
    %v34 = vld [vmem:[%s0 + $0x98] sm:$0xff]
    %v35 = vld [vmem:[%s0 + $0xa0] sm:$0xff]
    %v36 = vld [vmem:[%s0 + $0xa8] sm:$0xff]
    %v37 = vld [vmem:[%s0 + $0xb0] sm:$0xff]
    %v38 = vld [vmem:[%s0 + $0xb8] sm:$0xff]
    %v39 = vld [vmem:[%s0 + $0xc0] sm:$0xff]
    %v40 = vld [vmem:[%s0 + $0xc8] sm:$0xff]
    %v41 = vld [vmem:[%s0 + $0xd0] sm:$0xff]
    %v42 = vld [vmem:[%s0 + $0xd8] sm:$0xff]
    %v43 = vld [vmem:[%s0 + $0xe0] sm:$0xff]
    %v44 = vld [vmem:[%s0 + $0xe8] sm:$0xff]
    %v45 = vld [vmem:[%s0 + $0xf0] sm:$0xff]
    %v46 = vld [vmem:[%s0 + $0xf8] sm:$0xff]
    %v47 = vld [vmem:[%s0 + $0x100] sm:$0xff]
    %v48 = vld [vmem:[%s0 + $0x108] sm:$0xff]
    %v49 = vld [vmem:[%s0 + $0x110] sm:$0xff]
    %v50 = vld [vmem:[%s0 + $0x118] sm:$0xff]
    %v51 = vld [vmem:[%s0 + $0x120] sm:$0xff]
    %v52 = vld [vmem:[%s0 + $0x128] sm:$0xff]
    %v53 = vld [vmem:[%s0 + $0x130] sm:$0xff]
    %v54 = vld [vmem:[%s0 + $0x138] sm:$0xff]
    %v55 = vld [vmem:[%s0 + $0x140] sm:$0xff]
    %v56 = vld [vmem:[%s0 + $0x148] sm:$0xff]
    %v57 = vld [vmem:[%s0 + $0x150] sm:$0xff]
    %v58 = vld [vmem:[%s0 + $0x158] sm:$0xff]
    %v59 = vld [vmem:[%s0 + $0x160] sm:$0xff]
    %v60 = vld [vmem:[%s0 + $0x168] sm:$0xff]
    %v61 = vld [vmem:[%s0 + $0x170] sm:$0xff]
    %v62 = vld [vmem:[%s0 + $0x178] sm:$0xff]
    %v63 = vld [vmem:[%s0 + $0x180] sm:$0xff]
    %v64 = vld [vmem:[%s0 + $0x188] sm:$0xff]
    %v65 = vld [vmem:[%s0 + $0x190] sm:$0xff]
    %v66 = vld [vmem:[%s0 + $0x198] sm:$0xff]
    %v67 = vld [vmem:[%s0 + $0x1a0] sm:$0xff]
    %v68 = vld [vmem:[%s0 + $0x1a8] sm:$0xff]
    %v69 = vld [vmem:[%s0 + $0x1b0] sm:$0xff]
    %v70 = vld [vmem:[%s0 + $0x1b8] sm:$0xff]
    %v71 = vld [vmem:[%s0 + $0x1c0] sm:$0xff]
    %v72 = vld [vmem:[%s0 + $0x1c8] sm:$0xff]
    %v73 = vld [vmem:[%s0 + $0x1d0] sm:$0xff]
    %v74 = vld [vmem:[%s0 + $0x1d8] sm:$0xff]
    %v75 = vld [vmem:[%s0 + $0x1e0] sm:$0xff]
    %v76 = vld [vmem:[%s0 + $0x1e8] sm:$0xff]
    %v77 = vld [vmem:[%s0 + $0x1f0] sm:$0xff]
    %v78 = vld [vmem:[%s0 + $0x1f8] sm:$0xff]
    %vm79 = vcmask 523264
    %v80 = vsel %vm79, %v15, 0.0
    %81 = vadd.xlane.f32.xlu0 %v80
    %v82 = vpop.xlane.xlu0 %81
    %v83 = vsel %vm79, %v16, 0.0
    %84 = vadd.xlane.f32.xlu0 %v83
    %v85 = vpop.xlane.xlu0 %84
    %v86 = vsel %vm79, %v17, 0.0
    %87 = vadd.xlane.f32.xlu0 %v86
    %v88 = vpop.xlane.xlu0 %87
    %v89 = vsel %vm79, %v18, 0.0
    %90 = vadd.xlane.f32.xlu0 %v89
    %v91 = vpop.xlane.xlu0 %90
    %v92 = vsel %vm79, %v19, 0.0
    %93 = vadd.xlane.f32.xlu0 %v92
    %v94 = vpop.xlane.xlu0 %93
    %v95 = vsel %vm79, %v20, 0.0
    %96 = vadd.xlane.f32.xlu0 %v95
    %v97 = vpop.xlane.xlu0 %96
    %v98 = vsel %vm79, %v21, 0.0
    %99 = vadd.xlane.f32.xlu0 %v98
    %v100 = vpop.xlane.xlu0 %99
    %v101 = vsel %vm79, %v22, 0.0
    %102 = vadd.xlane.f32.xlu0 %v101
    %v103 = vpop.xlane.xlu0 %102
    %v104 = vsel %vm79, %v23, 0.0
    %105 = vadd.xlane.f32.xlu0 %v104
    %v106 = vpop.xlane.xlu0 %105
    %v107 = vsel %vm79, %v24, 0.0
    %108 = vadd.xlane.f32.xlu0 %v107
    %v109 = vpop.xlane.xlu0 %108
    %v110 = vsel %vm79, %v25, 0.0
    %111 = vadd.xlane.f32.xlu0 %v110
    %v112 = vpop.xlane.xlu0 %111
    %v113 = vsel %vm79, %v26, 0.0
    %114 = vadd.xlane.f32.xlu0 %v113
    %v115 = vpop.xlane.xlu0 %114
    %v116 = vsel %vm79, %v27, 0.0
    %117 = vadd.xlane.f32.xlu0 %v116
    %v118 = vpop.xlane.xlu0 %117
    %v119 = vsel %vm79, %v28, 0.0
    %120 = vadd.xlane.f32.xlu0 %v119
    %v121 = vpop.xlane.xlu0 %120
    %v122 = vsel %vm79, %v29, 0.0
    %123 = vadd.xlane.f32.xlu0 %v122
    %v124 = vpop.xlane.xlu0 %123
    %v125 = vsel %vm79, %v30, 0.0
    %126 = vadd.xlane.f32.xlu0 %v125
    %v127 = vpop.xlane.xlu0 %126
    %v128 = vsel %vm79, %v31, 0.0
    %129 = vadd.xlane.f32.xlu0 %v128
    %v130 = vpop.xlane.xlu0 %129
    %v131 = vsel %vm79, %v32, 0.0
    %132 = vadd.xlane.f32.xlu0 %v131
    %v133 = vpop.xlane.xlu0 %132
    %v134 = vsel %vm79, %v33, 0.0
    %135 = vadd.xlane.f32.xlu0 %v134
    %v136 = vpop.xlane.xlu0 %135
    %v137 = vsel %vm79, %v34, 0.0
    %138 = vadd.xlane.f32.xlu0 %v137
    %v139 = vpop.xlane.xlu0 %138
    %v140 = vsel %vm79, %v35, 0.0
    %141 = vadd.xlane.f32.xlu0 %v140
    %v142 = vpop.xlane.xlu0 %141
    %v143 = vsel %vm79, %v36, 0.0
    %144 = vadd.xlane.f32.xlu0 %v143
    %v145 = vpop.xlane.xlu0 %144
    %v146 = vsel %vm79, %v37, 0.0
    %147 = vadd.xlane.f32.xlu0 %v146
    %v148 = vpop.xlane.xlu0 %147
    %v149 = vsel %vm79, %v38, 0.0
    %150 = vadd.xlane.f32.xlu0 %v149
    %v151 = vpop.xlane.xlu0 %150
    %v152 = vsel %vm79, %v39, 0.0
    %153 = vadd.xlane.f32.xlu0 %v152
    %v154 = vpop.xlane.xlu0 %153
    %v155 = vsel %vm79, %v40, 0.0
    %156 = vadd.xlane.f32.xlu0 %v155
    %v157 = vpop.xlane.xlu0 %156
    %v158 = vsel %vm79, %v41, 0.0
    %159 = vadd.xlane.f32.xlu0 %v158
    %v160 = vpop.xlane.xlu0 %159
    %v161 = vsel %vm79, %v42, 0.0
    %162 = vadd.xlane.f32.xlu0 %v161
    %v163 = vpop.xlane.xlu0 %162
    %v164 = vsel %vm79, %v43, 0.0
    %165 = vadd.xlane.f32.xlu0 %v164
    %v166 = vpop.xlane.xlu0 %165
    %v167 = vsel %vm79, %v44, 0.0
    %168 = vadd.xlane.f32.xlu0 %v167
    %v169 = vpop.xlane.xlu0 %168
    %v170 = vsel %vm79, %v45, 0.0
    %171 = vadd.xlane.f32.xlu0 %v170
    %v172 = vpop.xlane.xlu0 %171
    %v173 = vsel %vm79, %v46, 0.0
    %174 = vadd.xlane.f32.xlu0 %v173
    %v175 = vpop.xlane.xlu0 %174
    %v176 = vsel %vm79, %v47, 0.0
    %177 = vadd.xlane.f32.xlu0 %v176
    %v178 = vpop.xlane.xlu0 %177
    %v179 = vsel %vm79, %v48, 0.0
    %180 = vadd.xlane.f32.xlu0 %v179
    %v181 = vpop.xlane.xlu0 %180
    %v182 = vsel %vm79, %v49, 0.0
    %183 = vadd.xlane.f32.xlu0 %v182
    %v184 = vpop.xlane.xlu0 %183
    %v185 = vsel %vm79, %v50, 0.0
    %186 = vadd.xlane.f32.xlu0 %v185
    %v187 = vpop.xlane.xlu0 %186
    %v188 = vsel %vm79, %v51, 0.0
    %189 = vadd.xlane.f32.xlu0 %v188
    %v190 = vpop.xlane.xlu0 %189
    %v191 = vsel %vm79, %v52, 0.0
    %192 = vadd.xlane.f32.xlu0 %v191
    %v193 = vpop.xlane.xlu0 %192
    %v194 = vsel %vm79, %v53, 0.0
    %195 = vadd.xlane.f32.xlu0 %v194
    %v196 = vpop.xlane.xlu0 %195
    %v197 = vsel %vm79, %v54, 0.0
    %198 = vadd.xlane.f32.xlu0 %v197
    %v199 = vpop.xlane.xlu0 %198
    %v200 = vsel %vm79, %v55, 0.0
    %201 = vadd.xlane.f32.xlu0 %v200
    %v202 = vpop.xlane.xlu0 %201
    %v203 = vsel %vm79, %v56, 0.0
    %204 = vadd.xlane.f32.xlu0 %v203
    %v205 = vpop.xlane.xlu0 %204
    %v206 = vsel %vm79, %v57, 0.0
    %207 = vadd.xlane.f32.xlu0 %v206
    %v208 = vpop.xlane.xlu0 %207
    %v209 = vsel %vm79, %v58, 0.0
    %210 = vadd.xlane.f32.xlu0 %v209
    %v211 = vpop.xlane.xlu0 %210
    %v212 = vsel %vm79, %v59, 0.0
    %213 = vadd.xlane.f32.xlu0 %v212
    %v214 = vpop.xlane.xlu0 %213
    %v215 = vsel %vm79, %v60, 0.0
    %216 = vadd.xlane.f32.xlu0 %v215
    %v217 = vpop.xlane.xlu0 %216
    %v218 = vsel %vm79, %v61, 0.0
    %219 = vadd.xlane.f32.xlu0 %v218
    %v220 = vpop.xlane.xlu0 %219
    %v221 = vsel %vm79, %v62, 0.0
    %222 = vadd.xlane.f32.xlu0 %v221
    %v223 = vpop.xlane.xlu0 %222
    %v224 = vsel %vm79, %v63, 0.0
    %225 = vadd.xlane.f32.xlu0 %v224
    %v226 = vpop.xlane.xlu0 %225
    %v227 = vsel %vm79, %v64, 0.0
    %228 = vadd.xlane.f32.xlu0 %v227
    %v229 = vpop.xlane.xlu0 %228
    %v230 = vsel %vm79, %v65, 0.0
    %231 = vadd.xlane.f32.xlu0 %v230
    %v232 = vpop.xlane.xlu0 %231
    %v233 = vsel %vm79, %v66, 0.0
    %234 = vadd.xlane.f32.xlu0 %v233
    %v235 = vpop.xlane.xlu0 %234
    %v236 = vsel %vm79, %v67, 0.0
    %237 = vadd.xlane.f32.xlu0 %v236
    %v238 = vpop.xlane.xlu0 %237
    %v239 = vsel %vm79, %v68, 0.0
    %240 = vadd.xlane.f32.xlu0 %v239
    %v241 = vpop.xlane.xlu0 %240
    %v242 = vsel %vm79, %v69, 0.0
    %243 = vadd.xlane.f32.xlu0 %v242
    %v244 = vpop.xlane.xlu0 %243
    %v245 = vsel %vm79, %v70, 0.0
    %246 = vadd.xlane.f32.xlu0 %v245
    %v247 = vpop.xlane.xlu0 %246
    %v248 = vsel %vm79, %v71, 0.0
    %249 = vadd.xlane.f32.xlu0 %v248
    %v250 = vpop.xlane.xlu0 %249
    %v251 = vsel %vm79, %v72, 0.0
    %252 = vadd.xlane.f32.xlu0 %v251
    %v253 = vpop.xlane.xlu0 %252
    %v254 = vsel %vm79, %v73, 0.0
    %255 = vadd.xlane.f32.xlu0 %v254
    %v256 = vpop.xlane.xlu0 %255
    %v257 = vsel %vm79, %v74, 0.0
    %258 = vadd.xlane.f32.xlu0 %v257
    %v259 = vpop.xlane.xlu0 %258
    %v260 = vsel %vm79, %v75, 0.0
    %261 = vadd.xlane.f32.xlu0 %v260
    %v262 = vpop.xlane.xlu0 %261
    %v263 = vsel %vm79, %v76, 0.0
    %264 = vadd.xlane.f32.xlu0 %v263
    %v265 = vpop.xlane.xlu0 %264
    %v266 = vsel %vm79, %v77, 0.0
    %267 = vadd.xlane.f32.xlu0 %v266
    %v268 = vpop.xlane.xlu0 %267
    %v269 = vsel %vm79, %v78, 0.0
    %270 = vadd.xlane.f32.xlu0 %v269
    %v271 = vpop.xlane.xlu0 %270
    %v272 = vld [vmem:[%s1] sm:$0xff]
    %v273 = vld [vmem:[%s1 + $0x8] sm:$0xff]
    %v274 = vld [vmem:[%s1 + $0x10] sm:$0xff]
    %v275 = vld [vmem:[%s1 + $0x18] sm:$0xff]
    %v276 = vld [vmem:[%s1 + $0x20] sm:$0xff]
    %v277 = vld [vmem:[%s1 + $0x28] sm:$0xff]
    %v278 = vld [vmem:[%s1 + $0x30] sm:$0xff]
    %v279 = vld [vmem:[%s1 + $0x38] sm:$0xff]
    %v280 = vld [vmem:[%s1 + $0x40] sm:$0xff]
    %v281 = vld [vmem:[%s1 + $0x48] sm:$0xff]
    %v282 = vld [vmem:[%s1 + $0x50] sm:$0xff]
    %v283 = vld [vmem:[%s1 + $0x58] sm:$0xff]
    %v284 = vld [vmem:[%s1 + $0x60] sm:$0xff]
    %v285 = vld [vmem:[%s1 + $0x68] sm:$0xff]
    %v286 = vld [vmem:[%s1 + $0x70] sm:$0xff]
    %v287 = vld [vmem:[%s1 + $0x78] sm:$0xff]
    %v288 = vld [vmem:[%s1 + $0x80] sm:$0xff]
    %v289 = vld [vmem:[%s1 + $0x88] sm:$0xff]
    %v290 = vld [vmem:[%s1 + $0x90] sm:$0xff]
    %v291 = vld [vmem:[%s1 + $0x98] sm:$0xff]
    %v292 = vld [vmem:[%s1 + $0xa0] sm:$0xff]
    %v293 = vld [vmem:[%s1 + $0xa8] sm:$0xff]
    %v294 = vld [vmem:[%s1 + $0xb0] sm:$0xff]
    %v295 = vld [vmem:[%s1 + $0xb8] sm:$0xff]
    %v296 = vld [vmem:[%s1 + $0xc0] sm:$0xff]
    %v297 = vld [vmem:[%s1 + $0xc8] sm:$0xff]
    %v298 = vld [vmem:[%s1 + $0xd0] sm:$0xff]
    %v299 = vld [vmem:[%s1 + $0xd8] sm:$0xff]
    %v300 = vld [vmem:[%s1 + $0xe0] sm:$0xff]
    %v301 = vld [vmem:[%s1 + $0xe8] sm:$0xff]
    %v302 = vld [vmem:[%s1 + $0xf0] sm:$0xff]
    %v303 = vld [vmem:[%s1 + $0xf8] sm:$0xff]
    %v304 = vld [vmem:[%s2] sm:$0x1]
    %v306 = vlaneseq
    %v307 = vshrl.u32 %v306, 7
    %v308 = vsub.s32 0, %v307
    %v309 = vrot.slane %v304, %v308
    %v375 = vlaneseq
    %v376 = vand.u32 %v375, 127
    %v377 = vlaneseq
    %v378 = vshrl.u32 %v377, 7
    %v379 = vsub.s32 %v376, %v378
    %v380 = vrot.slane %v82, %v379
    %v381 = vadd.s32 %v376, 4294967288
    %v382 = vlaneseq
    %v383 = vshrl.u32 %v382, 7
    %v384 = vsub.s32 %v381, %v383
    %v385 = vrot.slane %v85, %v384
    %vm386 = vcmask 130112
    %v387 = vsel %vm386, %v385, %v380
    %v388 = vadd.s32 %v376, 4294967280
    %v389 = vlaneseq
    %v390 = vshrl.u32 %v389, 7
    %v391 = vsub.s32 %v388, %v390
    %v392 = vrot.slane %v88, %v391
    %vm393 = vcmask 195712
    %v394 = vsel %vm393, %v392, %v387
    %v395 = vadd.s32 %v376, 4294967272
    %v396 = vlaneseq
    %v397 = vshrl.u32 %v396, 7
    %v398 = vsub.s32 %v395, %v397
    %v399 = vrot.slane %v91, %v398
    %vm400 = vcmask 261312
    %v401 = vsel %vm400, %v399, %v394
    %v402 = vadd.s32 %v376, 4294967264
    %v403 = vlaneseq
    %v404 = vshrl.u32 %v403, 7
    %v405 = vsub.s32 %v402, %v404
    %v406 = vrot.slane %v94, %v405
    %vm407 = vcmask 326912
    %v408 = vsel %vm407, %v406, %v401
    %v409 = vadd.s32 %v376, 4294967256
    %v410 = vlaneseq
    %v411 = vshrl.u32 %v410, 7
    %v412 = vsub.s32 %v409, %v411
    %v413 = vrot.slane %v97, %v412
    %vm414 = vcmask 392512
    %v415 = vsel %vm414, %v413, %v408
    %v416 = vadd.s32 %v376, 4294967248
    %v417 = vlaneseq
    %v418 = vshrl.u32 %v417, 7
    %v419 = vsub.s32 %v416, %v418
    %v420 = vrot.slane %v100, %v419
    %vm421 = vcmask 458112
    %v422 = vsel %vm421, %v420, %v415
    %v423 = vadd.s32 %v376, 4294967240
    %v424 = vlaneseq
    %v425 = vshrl.u32 %v424, 7
    %v426 = vsub.s32 %v423, %v425
    %v427 = vrot.slane %v103, %v426
    %vm428 = vcmask 523712
    %v429 = vsel %vm428, %v427, %v422
    %v430 = vadd.s32 %v376, 4294967232
    %v431 = vlaneseq
    %v432 = vshrl.u32 %v431, 7
    %v433 = vsub.s32 %v430, %v432
    %v434 = vrot.slane %v106, %v433
    %vm435 = vcmask 589312
    %v436 = vsel %vm435, %v434, %v429
    %v437 = vadd.s32 %v376, 4294967224
    %v438 = vlaneseq
    %v439 = vshrl.u32 %v438, 7
    %v440 = vsub.s32 %v437, %v439
    %v441 = vrot.slane %v109, %v440
    %vm442 = vcmask 654912
    %v443 = vsel %vm442, %v441, %v436
    %v444 = vadd.s32 %v376, 4294967216
    %v445 = vlaneseq
    %v446 = vshrl.u32 %v445, 7
    %v447 = vsub.s32 %v444, %v446
    %v448 = vrot.slane %v112, %v447
    %vm449 = vcmask 720512
    %v450 = vsel %vm449, %v448, %v443
    %v451 = vadd.s32 %v376, 4294967208
    %v452 = vlaneseq
    %v453 = vshrl.u32 %v452, 7
    %v454 = vsub.s32 %v451, %v453
    %v455 = vrot.slane %v115, %v454
    %vm456 = vcmask 786112
    %v457 = vsel %vm456, %v455, %v450
    %v458 = vadd.s32 %v376, 4294967200
    %v459 = vlaneseq
    %v460 = vshrl.u32 %v459, 7
    %v461 = vsub.s32 %v458, %v460
    %v462 = vrot.slane %v118, %v461
    %vm463 = vcmask 851712
    %v464 = vsel %vm463, %v462, %v457
    %v465 = vadd.s32 %v376, 4294967192
    %v466 = vlaneseq
    %v467 = vshrl.u32 %v466, 7
    %v468 = vsub.s32 %v465, %v467
    %v469 = vrot.slane %v121, %v468
    %vm470 = vcmask 917312
    %v471 = vsel %vm470, %v469, %v464
    %v472 = vadd.s32 %v376, 4294967184
    %v473 = vlaneseq
    %v474 = vshrl.u32 %v473, 7
    %v475 = vsub.s32 %v472, %v474
    %v476 = vrot.slane %v124, %v475
    %vm477 = vcmask 982912
    %v478 = vsel %vm477, %v476, %v471
    %v479 = vadd.s32 %v376, 4294967176
    %v480 = vlaneseq
    %v481 = vshrl.u32 %v480, 7
    %v482 = vsub.s32 %v479, %v481
    %v483 = vrot.slane %v127, %v482
    %vm484 = vcmask 1048512
    %v485 = vsel %vm484, %v483, %v478
    %v486 = vlaneseq
    %v487 = vshrl.u32 %v486, 7
    %v488 = vsub.s32 %v376, %v487
    %v489 = vrot.slane %v130, %v488
    %v490 = vlaneseq
    %v491 = vshrl.u32 %v490, 7
    %v492 = vsub.s32 %v381, %v491
    %v493 = vrot.slane %v133, %v492
    %v494 = vsel %vm386, %v493, %v489
    %v495 = vlaneseq
    %v496 = vshrl.u32 %v495, 7
    %v497 = vsub.s32 %v388, %v496
    %v498 = vrot.slane %v136, %v497
    %v499 = vsel %vm393, %v498, %v494
    %v500 = vlaneseq
    %v501 = vshrl.u32 %v500, 7
    %v502 = vsub.s32 %v395, %v501
    %v503 = vrot.slane %v139, %v502
    %v504 = vsel %vm400, %v503, %v499
    %v505 = vlaneseq
    %v506 = vshrl.u32 %v505, 7
    %v507 = vsub.s32 %v402, %v506
    %v508 = vrot.slane %v142, %v507
    %v509 = vsel %vm407, %v508, %v504
    %v510 = vlaneseq
    %v511 = vshrl.u32 %v510, 7
    %v512 = vsub.s32 %v409, %v511
    %v513 = vrot.slane %v145, %v512
    %v514 = vsel %vm414, %v513, %v509
    %v515 = vlaneseq
    %v516 = vshrl.u32 %v515, 7
    %v517 = vsub.s32 %v416, %v516
    %v518 = vrot.slane %v148, %v517
    %v519 = vsel %vm421, %v518, %v514
    %v520 = vlaneseq
    %v521 = vshrl.u32 %v520, 7
    %v522 = vsub.s32 %v423, %v521
    %v523 = vrot.slane %v151, %v522
    %v524 = vsel %vm428, %v523, %v519
    %v525 = vlaneseq
    %v526 = vshrl.u32 %v525, 7
    %v527 = vsub.s32 %v430, %v526
    %v528 = vrot.slane %v154, %v527
    %v529 = vsel %vm435, %v528, %v524
    %v530 = vlaneseq
    %v531 = vshrl.u32 %v530, 7
    %v532 = vsub.s32 %v437, %v531
    %v533 = vrot.slane %v157, %v532
    %v534 = vsel %vm442, %v533, %v529
    %v535 = vlaneseq
    %v536 = vshrl.u32 %v535, 7
    %v537 = vsub.s32 %v444, %v536
    %v538 = vrot.slane %v160, %v537
    %v539 = vsel %vm449, %v538, %v534
    %v540 = vlaneseq
    %v541 = vshrl.u32 %v540, 7
    %v542 = vsub.s32 %v451, %v541
    %v543 = vrot.slane %v163, %v542
    %v544 = vsel %vm456, %v543, %v539
    %v545 = vlaneseq
    %v546 = vshrl.u32 %v545, 7
    %v547 = vsub.s32 %v458, %v546
    %v548 = vrot.slane %v166, %v547
    %v549 = vsel %vm463, %v548, %v544
    %v550 = vlaneseq
    %v551 = vshrl.u32 %v550, 7
    %v552 = vsub.s32 %v465, %v551
    %v553 = vrot.slane %v169, %v552
    %v554 = vsel %vm470, %v553, %v549
    %v555 = vlaneseq
    %v556 = vshrl.u32 %v555, 7
    %v557 = vsub.s32 %v472, %v556
    %v558 = vrot.slane %v172, %v557
    %v559 = vsel %vm477, %v558, %v554
    %v560 = vlaneseq
    %v561 = vshrl.u32 %v560, 7
    %v562 = vsub.s32 %v479, %v561
    %v563 = vrot.slane %v175, %v562
    %v564 = vsel %vm484, %v563, %v559
    %v565 = vlaneseq
    %v566 = vshrl.u32 %v565, 7
    %v567 = vsub.s32 %v376, %v566
    %v568 = vrot.slane %v178, %v567
    %v569 = vlaneseq
    %v570 = vshrl.u32 %v569, 7
    %v571 = vsub.s32 %v381, %v570
    %v572 = vrot.slane %v181, %v571
    %v573 = vsel %vm386, %v572, %v568
    %v574 = vlaneseq
    %v575 = vshrl.u32 %v574, 7
    %v576 = vsub.s32 %v388, %v575
    %v577 = vrot.slane %v184, %v576
    %v578 = vsel %vm393, %v577, %v573
    %v579 = vlaneseq
    %v580 = vshrl.u32 %v579, 7
    %v581 = vsub.s32 %v395, %v580
    %v582 = vrot.slane %v187, %v581
    %v583 = vsel %vm400, %v582, %v578
    %v584 = vlaneseq
    %v585 = vshrl.u32 %v584, 7
    %v586 = vsub.s32 %v402, %v585
    %v587 = vrot.slane %v190, %v586
    %v588 = vsel %vm407, %v587, %v583
    %v589 = vlaneseq
    %v590 = vshrl.u32 %v589, 7
    %v591 = vsub.s32 %v409, %v590
    %v592 = vrot.slane %v193, %v591
    %v593 = vsel %vm414, %v592, %v588
    %v594 = vlaneseq
    %v595 = vshrl.u32 %v594, 7
    %v596 = vsub.s32 %v416, %v595
    %v597 = vrot.slane %v196, %v596
    %v598 = vsel %vm421, %v597, %v593
    %v599 = vlaneseq
    %v600 = vshrl.u32 %v599, 7
    %v601 = vsub.s32 %v423, %v600
    %v602 = vrot.slane %v199, %v601
    %v603 = vsel %vm428, %v602, %v598
    %v604 = vlaneseq
    %v605 = vshrl.u32 %v604, 7
    %v606 = vsub.s32 %v430, %v605
    %v607 = vrot.slane %v202, %v606
    %v608 = vsel %vm435, %v607, %v603
    %v609 = vlaneseq
    %v610 = vshrl.u32 %v609, 7
    %v611 = vsub.s32 %v437, %v610
    %v612 = vrot.slane %v205, %v611
    %v613 = vsel %vm442, %v612, %v608
    %v614 = vlaneseq
    %v615 = vshrl.u32 %v614, 7
    %v616 = vsub.s32 %v444, %v615
    %v617 = vrot.slane %v208, %v616
    %v618 = vsel %vm449, %v617, %v613
    %v619 = vlaneseq
    %v620 = vshrl.u32 %v619, 7
    %v621 = vsub.s32 %v451, %v620
    %v622 = vrot.slane %v211, %v621
    %v623 = vsel %vm456, %v622, %v618
    %v624 = vlaneseq
    %v625 = vshrl.u32 %v624, 7
    %v626 = vsub.s32 %v458, %v625
    %v627 = vrot.slane %v214, %v626
    %v628 = vsel %vm463, %v627, %v623
    %v629 = vlaneseq
    %v630 = vshrl.u32 %v629, 7
    %v631 = vsub.s32 %v465, %v630
    %v632 = vrot.slane %v217, %v631
    %v633 = vsel %vm470, %v632, %v628
    %v634 = vlaneseq
    %v635 = vshrl.u32 %v634, 7
    %v636 = vsub.s32 %v472, %v635
    %v637 = vrot.slane %v220, %v636
    %v638 = vsel %vm477, %v637, %v633
    %v639 = vlaneseq
    %v640 = vshrl.u32 %v639, 7
    %v641 = vsub.s32 %v479, %v640
    %v642 = vrot.slane %v223, %v641
    %v643 = vsel %vm484, %v642, %v638
    %v644 = vlaneseq
    %v645 = vshrl.u32 %v644, 7
    %v646 = vsub.s32 %v376, %v645
    %v647 = vrot.slane %v226, %v646
    %v648 = vlaneseq
    %v649 = vshrl.u32 %v648, 7
    %v650 = vsub.s32 %v381, %v649
    %v651 = vrot.slane %v229, %v650
    %v652 = vsel %vm386, %v651, %v647
    %v653 = vlaneseq
    %v654 = vshrl.u32 %v653, 7
    %v655 = vsub.s32 %v388, %v654
    %v656 = vrot.slane %v232, %v655
    %v657 = vsel %vm393, %v656, %v652
    %v658 = vlaneseq
    %v659 = vshrl.u32 %v658, 7
    %v660 = vsub.s32 %v395, %v659
    %v661 = vrot.slane %v235, %v660
    %v662 = vsel %vm400, %v661, %v657
    %v663 = vlaneseq
    %v664 = vshrl.u32 %v663, 7
    %v665 = vsub.s32 %v402, %v664
    %v666 = vrot.slane %v238, %v665
    %v667 = vsel %vm407, %v666, %v662
    %v668 = vlaneseq
    %v669 = vshrl.u32 %v668, 7
    %v670 = vsub.s32 %v409, %v669
    %v671 = vrot.slane %v241, %v670
    %v672 = vsel %vm414, %v671, %v667
    %v673 = vlaneseq
    %v674 = vshrl.u32 %v673, 7
    %v675 = vsub.s32 %v416, %v674
    %v676 = vrot.slane %v244, %v675
    %v677 = vsel %vm421, %v676, %v672
    %v678 = vlaneseq
    %v679 = vshrl.u32 %v678, 7
    %v680 = vsub.s32 %v423, %v679
    %v681 = vrot.slane %v247, %v680
    %v682 = vsel %vm428, %v681, %v677
    %v683 = vlaneseq
    %v684 = vshrl.u32 %v683, 7
    %v685 = vsub.s32 %v430, %v684
    %v686 = vrot.slane %v250, %v685
    %v687 = vsel %vm435, %v686, %v682
    %v688 = vlaneseq
    %v689 = vshrl.u32 %v688, 7
    %v690 = vsub.s32 %v437, %v689
    %v691 = vrot.slane %v253, %v690
    %v692 = vsel %vm442, %v691, %v687
    %v693 = vlaneseq
    %v694 = vshrl.u32 %v693, 7
    %v695 = vsub.s32 %v444, %v694
    %v696 = vrot.slane %v256, %v695
    %v697 = vsel %vm449, %v696, %v692
    %v698 = vlaneseq
    %v699 = vshrl.u32 %v698, 7
    %v700 = vsub.s32 %v451, %v699
    %v701 = vrot.slane %v259, %v700
    %v702 = vsel %vm456, %v701, %v697
    %v703 = vlaneseq
    %v704 = vshrl.u32 %v703, 7
    %v705 = vsub.s32 %v458, %v704
    %v706 = vrot.slane %v262, %v705
    %v707 = vsel %vm463, %v706, %v702
    %v708 = vlaneseq
    %v709 = vshrl.u32 %v708, 7
    %v710 = vsub.s32 %v465, %v709
    %v711 = vrot.slane %v265, %v710
    %v712 = vsel %vm470, %v711, %v707
    %v713 = vlaneseq
    %v714 = vshrl.u32 %v713, 7
    %v715 = vsub.s32 %v472, %v714
    %v716 = vrot.slane %v268, %v715
    %v717 = vsel %vm477, %v716, %v712
    %v718 = vlaneseq
    %v719 = vshrl.u32 %v718, 7
    %v720 = vsub.s32 %v479, %v719
    %v721 = vrot.slane %v271, %v720
    %v722 = vsel %vm484, %v721, %v717
    %vm723 = vcmask 1041409
    %v724 = vsel %vm723, %v643, %v485
    %v725 = vsel %vm723, %v722, %v564
    %728 = vmatprep.subr.mxu0 0.0
    %729 = vmatpush1.msra.mxu0 %v287
    %730 = vmatprep.subr.mxu0 0.0
    %731 = vmatpush1.msra.mxu0 %v286
    %732 = vmatprep.subr.mxu0 0.0
    %733 = vmatpush1.msra.mxu0 %v285
    %734 = vmatprep.subr.mxu0 0.0
    %735 = vmatpush1.msra.mxu0 %v284
    %736 = vmatprep.subr.mxu0 0.0
    %737 = vmatpush1.msra.mxu0 %v283
    %738 = vmatprep.subr.mxu0 0.0
    %739 = vmatpush1.msra.mxu0 %v282
    %740 = vmatprep.subr.mxu0 0.0
    %741 = vmatpush1.msra.mxu0 %v281
    %742 = vmatprep.subr.mxu0 0.0
    %743 = vmatpush1.msra.mxu0 %v280
    %744 = vmatprep.subr.mxu0 0.0
    %745 = vmatpush1.msra.mxu0 %v279
    %746 = vmatprep.subr.mxu0 0.0
    %747 = vmatpush1.msra.mxu0 %v278
    %748 = vmatprep.subr.mxu0 0.0
    %749 = vmatpush1.msra.mxu0 %v277
    %750 = vmatprep.subr.mxu0 0.0
    %751 = vmatpush1.msra.mxu0 %v276
    %752 = vmatprep.subr.mxu0 0.0
    %753 = vmatpush1.msra.mxu0 %v275
    %754 = vmatprep.subr.mxu0 0.0
    %755 = vmatpush1.msra.mxu0 %v274
    %756 = vmatprep.subr.mxu0 0.0
    %757 = vmatpush1.msra.mxu0 %v273
    %758 = vmatprep.subr.mxu0 0.0
    %759 = vmatpush1.msra.mxu0 %v272
    %760 = vmatprep.subr.mxu0 0.0
    %761 = vmatpush2.msra.mxu0 %v303
    %762 = vmatprep.subr.mxu0 0.0
    %763 = vmatpush2.msra.mxu0 %v302
    %764 = vmatprep.subr.mxu0 0.0
    %765 = vmatpush2.msra.mxu0 %v301
    %766 = vmatprep.subr.mxu0 0.0
    %767 = vmatpush2.msra.mxu0 %v300
    %768 = vmatprep.subr.mxu0 0.0
    %769 = vmatpush2.msra.mxu0 %v299
    %770 = vmatprep.subr.mxu0 0.0
    %771 = vmatpush2.msra.mxu0 %v298
    %772 = vmatprep.subr.mxu0 0.0
    %773 = vmatpush2.msra.mxu0 %v297
    %774 = vmatprep.subr.mxu0 0.0
    %775 = vmatpush2.msra.mxu0 %v296
    %776 = vmatprep.subr.mxu0 0.0
    %777 = vmatpush2.msra.mxu0 %v295
    %778 = vmatprep.subr.mxu0 0.0
    %779 = vmatpush2.msra.mxu0 %v294
    %780 = vmatprep.subr.mxu0 0.0
    %781 = vmatpush2.msra.mxu0 %v293
    %782 = vmatprep.subr.mxu0 0.0
    %783 = vmatpush2.msra.mxu0 %v292
    %784 = vmatprep.subr.mxu0 0.0
    %785 = vmatpush2.msra.mxu0 %v291
    %786 = vmatprep.subr.mxu0 0.0
    %787 = vmatpush2.msra.mxu0 %v290
    %788 = vmatprep.subr.mxu0 0.0
    %789 = vmatpush2.msra.mxu0 %v289
    %790 = vmatprep.subr.mxu0 0.0
    %791 = vmatpush2.msra.mxu0 %v288
    %792 = vmatprep.mubr.f32.mxu0 %v725
    %793 = vmatmul.mubr.f32.gmra.mxu0 %v724
    %v794 = vpop.f32.mrf.mxu0
    %v795 = vadd.f32 %v309, %v794
    %v796 = vpop.f32.mrf.mxu0
    %797 = vdwg.mxu0
    %798 = vst [vmem:[#allocation2] sm:$0x3] %v795
    // Predicated region
    $region14: #{tpu_custom_call.1} parent=1 // pred_check
      _
    $region15: #{tpu_custom_call.1} parent=1 // pred_check_branch
      %800 = sbr.rel (0) target = $region17
    $region16: #{tpu_custom_call.1} parent=1 // pred_region
      %s802 = ssub.s32 32, 32
      %803 = vsyncadd [#allocation3], %s802
      %s805 = sshll.u32 [#allocation2], 4
      %s806 = int_to_ptr.vmem [resolvable:$true] %s805
      %808 = dma.vmem_to_hbm [thread:$0]  %s806, 32, %s3, [#allocation3]
    $region17: #{tpu_custom_call.1} parent=1 // pred_fallthru
      _
    // Predicated region
    $region18: #{tpu_custom_call.1} parent=1 // pred_check
      _
    $region19: #{tpu_custom_call.1} parent=1 // pred_check_branch
      %810 = sbr.rel (0) target = $region21
    $region20: #{tpu_custom_call.1} parent=1 // pred_region
      %811 = dma.done [#allocation3], 32
    $region21: #{tpu_custom_call.1} parent=1 // pred_fallthru
      _
    %812 = vsyncpa [#allocation3], 1

</llo_original>
